<compile_context>
chip_gen: v7x
topology: tpu7x:2x2x1
jax: 0.10.0
libtpu: 0.0.40
codegen_flags: <defaults>
</compile_context>

<pallas_src>
import numpy as np
import jax
import jax.numpy as jnp
from jax.experimental import pallas as pl
from jax.experimental.pallas import tpu as pltpu


# ----------------------------------------------------------------------------
# Host-side anchor generation (classic py-faster-rcnn generate_anchors).
# ----------------------------------------------------------------------------
def _whctrs(anchor):
    w = anchor[2] - anchor[0] + 1
    h = anchor[3] - anchor[1] + 1
    x_ctr = anchor[0] + 0.5 * (w - 1)
    y_ctr = anchor[1] + 0.5 * (h - 1)
    return w, h, x_ctr, y_ctr


def _mkanchors(ws, hs, x_ctr, y_ctr):
    ws = ws[:, np.newaxis]
    hs = hs[:, np.newaxis]
    return np.hstack((x_ctr - 0.5 * (ws - 1),
                      y_ctr - 0.5 * (hs - 1),
                      x_ctr + 0.5 * (ws - 1),
                      y_ctr + 0.5 * (hs - 1)))


def _ratio_enum(anchor, ratios):
    w, h, x_ctr, y_ctr = _whctrs(anchor)
    size = w * h
    size_ratios = size / ratios
    ws = np.round(np.sqrt(size_ratios))
    hs = np.round(ws * ratios)
    return _mkanchors(ws, hs, x_ctr, y_ctr)


def _scale_enum(anchor, scales):
    w, h, x_ctr, y_ctr = _whctrs(anchor)
    ws = w * scales
    hs = h * scales
    return _mkanchors(ws, hs, x_ctr, y_ctr)


def generate_anchors(base_size=16, ratios=np.array([0.5, 1, 2]),
                     scales=2 ** np.arange(3, 6)):
    base_anchor = np.array([1, 1, base_size, base_size], dtype=np.float64) - 1
    ratio_anchors = _ratio_enum(base_anchor, ratios)
    anchors = np.vstack([_scale_enum(ratio_anchors[i, :], scales)
                         for i in range(ratio_anchors.shape[0])])
    return anchors


def _build_anchor_geometry_planes(base_anchors, H, W, feat_stride, HWp):
    """Precompute (A, 4, HWp) planes = [ctr_x, ctr_y, width, height] of the shifted anchors."""
    A = base_anchors.shape[0]
    HW = H * W
    shift_x = np.arange(W, dtype=np.float32) * feat_stride
    shift_y = np.arange(H, dtype=np.float32) * feat_stride
    sx, sy = np.meshgrid(shift_x, shift_y)          # (H, W), k = h*W + w ordering
    sx = sx.reshape(-1)
    sy = sy.reshape(-1)
    ba = base_anchors.astype(np.float32)
    widths = (ba[:, 2] - ba[:, 0] + 1.0)[:, None] * np.ones((1, HW), np.float32)
    heights = (ba[:, 3] - ba[:, 1] + 1.0)[:, None] * np.ones((1, HW), np.float32)
    ctr_x = (ba[:, 0] + 0.5 * (ba[:, 2] - ba[:, 0] + 1.0))[:, None] + sx[None, :]
    ctr_y = (ba[:, 1] + 0.5 * (ba[:, 3] - ba[:, 1] + 1.0))[:, None] + sy[None, :]
    planes = np.stack([ctr_x, ctr_y, widths, heights], axis=1).astype(np.float32)  # (A,4,HW)
    if HWp > HW:
        planes = np.pad(planes, ((0, 0), (0, 0), (0, HWp - HW)))
    return planes


# ----------------------------------------------------------------------------
# Pallas kernel: bbox_transform_inv in coordinate-plane layout.
# Block shapes:  deltas (1, A, 4, Rblk, 128), anchors (A, 4, Rblk, 128),
#                out    (1, A, 4, Rblk, 128).  All f32, lane-dense.
# ----------------------------------------------------------------------------
def _decode_kernel(d_ref, a_ref, o_ref):
    d = d_ref[0]              # (A, 4, Rblk, 128)  deltas planes: dx, dy, dw, dh
    g = a_ref[...]            # (A, 4, Rblk, 128)  anchor planes: ctr_x, ctr_y, w, h
    dx, dy, dw, dh = d[:, 0], d[:, 1], d[:, 2], d[:, 3]
    cx, cy, ws, hs = g[:, 0], g[:, 1], g[:, 2], g[:, 3]

    pred_ctr_x = dx * ws + cx
    pred_ctr_y = dy * hs + cy
    half_w = 0.5 * (jnp.exp(dw) * ws)      # exp -> EUP slot (free under HBM bound)
    half_h = 0.5 * (jnp.exp(dh) * hs)

    boxes = jnp.stack([pred_ctr_x - half_w,
                       pred_ctr_y - half_h,
                       pred_ctr_x + half_w,
                       pred_ctr_y + half_h], axis=1)   # (A, 4, Rblk, 128)
    o_ref[0] = boxes                                    # single full-block unmasked store


def _choose_tiling(A, HW, vmem_budget_bytes=20 * 1024 * 1024):
    """Pick (R, Rblk): HW padded to R*128; block second-minor = Rblk.

    3 arrays x 2 pipeline buffers x (A*4*Rblk*128*4B) must stay inside the scoped-VMEM
    budget (conservative for v7x's 64 MiB physical / 32 MiB scoped default).
    """
    bytes_per_r = 6 * A * 4 * 128 * 4
    max_rblk = max(8, vmem_budget_bytes // bytes_per_r)
    r_min = -(-HW // 128)                      # cdiv(HW, 128)
    if r_min <= max_rblk:
        rblk = r_min                            # full second-minor dim -> always legal
        r = r_min
    else:
        rblk = (max_rblk // 8) * 8              # (8,128)-aligned partial blocks
        r = -(-r_min // rblk) * rblk
    return r, rblk


# ----------------------------------------------------------------------------
# Module wrapper (mirrors my_proposal_layer).
# ----------------------------------------------------------------------------
class MyProposalLayerPallas:
    def __init__(self, feat_stride, scales, ratios):
        self.feat_stride = feat_stride
        self.scales = scales
        self.ratios = ratios
        self.anchor_num = len(scales) * len(ratios)
        self.base_anchors = generate_anchors(
            scales=np.array(scales), ratios=np.array(ratios)).astype(np.float32)

    def __call__(self, inputs):
        rpn_cls_prob, rpn_bbox_pred, im_info, cfg_key = inputs
        del im_info, cfg_key  # TODO(synk): only used by the NMS stage, which the reference truncates.

        A = self.anchor_num
        B, C, H, W = rpn_bbox_pred.shape
        assert C == 4 * A, "bbox_pred channels must be 4 * anchor_num"
        HW = H * W

        # Foreground scores: pure XLA slice, not routed through the kernel.
        scores = rpn_cls_prob[:, A:, :, :]

        R, Rblk = _choose_tiling(A, HW)
        HWp = R * 128

        # Free reshape (channel layout is [anchor*4 + coord]); pad HW up to a lane multiple.
        deltas = rpn_bbox_pred.reshape(B, A, 4, HW).astype(jnp.float32)
        if HWp > HW:
            deltas = jnp.pad(deltas, ((0, 0), (0, 0), (0, 0), (0, HWp - HW)))
        deltas = deltas.reshape(B, A, 4, R, 128)

        anc_planes = jnp.asarray(
            _build_anchor_geometry_planes(self.base_anchors, H, W, self.feat_stride, HWp)
        ).reshape(A, 4, R, 128)

        num_r = R // Rblk
        grid = (num_r, B)  # batch innermost -> anchors block reused (no re-DMA) across batch

        out_planes = pl.pallas_call(
            _decode_kernel,
            out_shape=jax.ShapeDtypeStruct((B, A, 4, R, 128), jnp.float32),
            grid_spec=pltpu.PrefetchScalarGridSpec(
                num_scalar_prefetch=0,
                grid=grid,
                in_specs=[
                    pl.BlockSpec((1, A, 4, Rblk, 128), lambda r, b: (b, 0, 0, r, 0)),
                    # anchors: index_map ignores the batch index -> fetched once per R tile
                    pl.BlockSpec((A, 4, Rblk, 128), lambda r, b: (0, 0, r, 0)),
                ],
                out_specs=pl.BlockSpec((1, A, 4, Rblk, 128), lambda r, b: (b, 0, 0, r, 0)),
            ),
            compiler_params=pltpu.CompilerParams(
                dimension_semantics=("parallel", "parallel")),
        )(deltas, anc_planes)

        # Pure layout reorder to the reference ordering (B, H*W*A, 4) with box index
        # k*A + a (k = h*W + w).  Consumers that accept the coordinate-plane layout
        # (B, A, 4, H*W) can skip this transpose entirely.
        planes = out_planes.reshape(B, A, 4, HWp)[:, :, :, :HW]
        proposals = jnp.transpose(planes, (0, 3, 1, 2)).reshape(B, HW * A, 4)
        return scores, proposals


# ----------------------------------------------------------------------------
# Pure-numpy reference (standard Faster R-CNN proposal decode, truncated like the module).
# ----------------------------------------------------------------------------
def _reference_decode(bbox_deltas, base_anchors, feat_stride):
    B, C, H, W = bbox_deltas.shape
    shift_x = np.arange(W) * feat_stride
    shift_y = np.arange(H) * feat_stride
    sx, sy = np.meshgrid(shift_x, shift_y)
    shifts = np.stack([sx.ravel(), sy.ravel(), sx.ravel(), sy.ravel()], axis=1)      # (K, 4)
    anchors = (base_anchors[None, :, :] + shifts[:, None, :]).reshape(-1, 4)          # (K*A, 4)
    deltas = bbox_deltas.transpose(0, 2, 3, 1).reshape(B, -1, 4)                      # (B, K*A, 4)

    widths = anchors[:, 2] - anchors[:, 0] + 1.0
    heights = anchors[:, 3] - anchors[:, 1] + 1.0
    ctr_x = anchors[:, 0] + 0.5 * widths
    ctr_y = anchors[:, 1] + 0.5 * heights

    dx, dy, dw, dh = deltas[..., 0], deltas[..., 1], deltas[..., 2], deltas[..., 3]
    pcx = dx * widths + ctr_x
    pcy = dy * heights + ctr_y
    pw = np.exp(dw) * widths
    ph = np.exp(dh) * heights
    boxes = np.stack([pcx - 0.5 * pw, pcy - 0.5 * ph,
                      pcx + 0.5 * pw, pcy + 0.5 * ph], axis=2)
    return boxes.astype(np.float32)


if __name__ == "__main__":
    feat_stride = 16
    scales = (8, 16, 32)
    ratios = (0.5, 1.0, 2.0)
    A = len(scales) * len(ratios)          # 9
    B, H, W = 2, 16, 16

    key = jax.random.PRNGKey(0)
    k1, k2 = jax.random.split(key)
    rpn_cls_prob = jax.random.uniform(k1, (B, 2 * A, H, W), dtype=jnp.float32)
    rpn_bbox_pred = 0.1 * jax.random.normal(k2, (B, 4 * A, H, W), dtype=jnp.float32)
    im_info = jnp.array([[H * feat_stride, W * feat_stride, 1.0]] * B, dtype=jnp.float32)
    cfg_key = "TEST"

    layer = MyProposalLayerPallas(feat_stride, scales, ratios)
    scores, proposals = layer((rpn_cls_prob, rpn_bbox_pred, im_info, cfg_key))
    (scores, proposals) = jax.block_until_ready((scores, proposals))

    # Validate against the numpy reference.
    ref_scores = np.asarray(rpn_cls_prob)[:, A:, :, :]
    ref_props = _reference_decode(np.asarray(rpn_bbox_pred), layer.base_anchors, feat_stride)

    assert np.array_equal(np.asarray(scores), ref_scores), "scores slice mismatch"
    assert np.allclose(np.asarray(proposals), ref_props, rtol=1e-4, atol=1e-2), (
        "max abs err = %g" % np.max(np.abs(np.asarray(proposals) - ref_props)))

    print("KERNEL_OK")
</pallas_src>

<mosaic_0001>
module attributes {stable_mosaic.version = 11 : i64} {
  func.func @_decode_kernel(%arg0: i32, %arg1: i32, %arg2: memref<1x9x4x2x128xf32, #tpu.memory_space<vmem>>, %arg3: memref<9x4x2x128xf32, #tpu.memory_space<vmem>>, %arg4: memref<1x9x4x2x128xf32, #tpu.memory_space<vmem>>) attributes {dimension_semantics = [#tpu.dimension_semantics<parallel>, #tpu.dimension_semantics<parallel>], iteration_bounds = array<i64: 1, 2>, scalar_prefetch = 0 : i64, scratch_operands = 0 : i64, tpu.core_type = #tpu.core_type<tc>, window_params = [{transform_indices = @transform_0, window_bounds = array<i64: 1, 9, 4, 2, 128>}, {transform_indices = @transform_1, window_bounds = array<i64: 9, 4, 2, 128>}, {transform_indices = @transform_2, window_bounds = array<i64: 1, 9, 4, 2, 128>}]} {
    %c0 = arith.constant 0 : index
    %c0_0 = arith.constant 0 : index
    %c0_1 = arith.constant 0 : index
    %c0_2 = arith.constant 0 : index
    %c0_3 = arith.constant 0 : index
    %0 = vector.load %arg2[%c0, %c0_0, %c0_1, %c0_2, %c0_3] : memref<1x9x4x2x128xf32, #tpu.memory_space<vmem>>, vector<1x9x4x2x128xf32>
    %1 = vector.shape_cast %0 : vector<1x9x4x2x128xf32> to vector<9x4x2x128xf32>
    %c0_4 = arith.constant 0 : index
    %c0_5 = arith.constant 0 : index
    %c0_6 = arith.constant 0 : index
    %c0_7 = arith.constant 0 : index
    %2 = vector.load %arg3[%c0_4, %c0_5, %c0_6, %c0_7] : memref<9x4x2x128xf32, #tpu.memory_space<vmem>>, vector<9x4x2x128xf32>
    %3 = vector.extract_strided_slice %1 {offsets = [0, 0, 0, 0], sizes = [9, 1, 2, 128], strides = [1, 1, 1, 1]} : vector<9x4x2x128xf32> to vector<9x1x2x128xf32>
    %4 = vector.shape_cast %3 : vector<9x1x2x128xf32> to vector<9x2x128xf32>
    %5 = vector.extract_strided_slice %1 {offsets = [0, 1, 0, 0], sizes = [9, 1, 2, 128], strides = [1, 1, 1, 1]} : vector<9x4x2x128xf32> to vector<9x1x2x128xf32>
    %6 = vector.shape_cast %5 : vector<9x1x2x128xf32> to vector<9x2x128xf32>
    %7 = vector.extract_strided_slice %1 {offsets = [0, 2, 0, 0], sizes = [9, 1, 2, 128], strides = [1, 1, 1, 1]} : vector<9x4x2x128xf32> to vector<9x1x2x128xf32>
    %8 = vector.shape_cast %7 : vector<9x1x2x128xf32> to vector<9x2x128xf32>
    %9 = vector.extract_strided_slice %1 {offsets = [0, 3, 0, 0], sizes = [9, 1, 2, 128], strides = [1, 1, 1, 1]} : vector<9x4x2x128xf32> to vector<9x1x2x128xf32>
    %10 = vector.shape_cast %9 : vector<9x1x2x128xf32> to vector<9x2x128xf32>
    %11 = vector.extract_strided_slice %2 {offsets = [0, 0, 0, 0], sizes = [9, 1, 2, 128], strides = [1, 1, 1, 1]} : vector<9x4x2x128xf32> to vector<9x1x2x128xf32>
    %12 = vector.shape_cast %11 : vector<9x1x2x128xf32> to vector<9x2x128xf32>
    %13 = vector.extract_strided_slice %2 {offsets = [0, 1, 0, 0], sizes = [9, 1, 2, 128], strides = [1, 1, 1, 1]} : vector<9x4x2x128xf32> to vector<9x1x2x128xf32>
    %14 = vector.shape_cast %13 : vector<9x1x2x128xf32> to vector<9x2x128xf32>
    %15 = vector.extract_strided_slice %2 {offsets = [0, 2, 0, 0], sizes = [9, 1, 2, 128], strides = [1, 1, 1, 1]} : vector<9x4x2x128xf32> to vector<9x1x2x128xf32>
    %16 = vector.shape_cast %15 : vector<9x1x2x128xf32> to vector<9x2x128xf32>
    %17 = vector.extract_strided_slice %2 {offsets = [0, 3, 0, 0], sizes = [9, 1, 2, 128], strides = [1, 1, 1, 1]} : vector<9x4x2x128xf32> to vector<9x1x2x128xf32>
    %18 = vector.shape_cast %17 : vector<9x1x2x128xf32> to vector<9x2x128xf32>
    %19 = arith.mulf %4, %16 : vector<9x2x128xf32>
    %20 = arith.addf %19, %12 : vector<9x2x128xf32>
    %21 = arith.mulf %6, %18 : vector<9x2x128xf32>
    %22 = arith.addf %21, %14 : vector<9x2x128xf32>
    %23 = math.exp %8 : vector<9x2x128xf32>
    %24 = arith.mulf %23, %16 : vector<9x2x128xf32>
    %cst = arith.constant 5.000000e-01 : f32
    %25 = vector.broadcast %cst : f32 to vector<9x2x128xf32>
    %26 = arith.mulf %25, %24 : vector<9x2x128xf32>
    %27 = math.exp %10 : vector<9x2x128xf32>
    %28 = arith.mulf %27, %18 : vector<9x2x128xf32>
    %cst_8 = arith.constant 5.000000e-01 : f32
    %29 = vector.broadcast %cst_8 : f32 to vector<9x2x128xf32>
    %30 = arith.mulf %29, %28 : vector<9x2x128xf32>
    %31 = arith.subf %20, %26 : vector<9x2x128xf32>
    %32 = arith.subf %22, %30 : vector<9x2x128xf32>
    %33 = arith.addf %20, %26 : vector<9x2x128xf32>
    %34 = arith.addf %22, %30 : vector<9x2x128xf32>
    %35 = vector.shape_cast %31 : vector<9x2x128xf32> to vector<9x1x2x128xf32>
    %36 = vector.shape_cast %32 : vector<9x2x128xf32> to vector<9x1x2x128xf32>
    %37 = vector.shape_cast %33 : vector<9x2x128xf32> to vector<9x1x2x128xf32>
    %38 = vector.shape_cast %34 : vector<9x2x128xf32> to vector<9x1x2x128xf32>
    %39 = tpu.concatenate %35, %36, %37, %38 in 1 : vector<9x1x2x128xf32>, vector<9x1x2x128xf32>, vector<9x1x2x128xf32>, vector<9x1x2x128xf32> -> vector<9x4x2x128xf32>
    %c0_9 = arith.constant 0 : index
    %c0_10 = arith.constant 0 : index
    %c0_11 = arith.constant 0 : index
    %c0_12 = arith.constant 0 : index
    %c0_13 = arith.constant 0 : index
    %40 = vector.load %arg4[%c0_9, %c0_10, %c0_11, %c0_12, %c0_13] : memref<1x9x4x2x128xf32, #tpu.memory_space<vmem>>, vector<1x9x4x2x128xf32>
    %41 = vector.shape_cast %40 : vector<1x9x4x2x128xf32> to vector<9x4x2x128xf32>
    %42 = vector.shape_cast %39 : vector<9x4x2x128xf32> to vector<1x9x4x2x128xf32>
    tpu.vector_store %arg4[%c0_9, %c0_10, %c0_11, %c0_12, %c0_13], %42 {strides = array<i32>} : memref<1x9x4x2x128xf32, #tpu.memory_space<vmem>>, vector<1x9x4x2x128xf32>,
    return
  }
  func.func @transform_0(%arg0: i32, %arg1: i32) -> (i32, i32, i32, i32, i32) {
    %c0_i32 = arith.constant 0 : i32
    %c0_i32_0 = arith.constant 0 : i32
    %c0_i32_1 = arith.constant 0 : i32
    %c0_i32_2 = arith.constant 0 : i32
    return %arg1, %c0_i32, %c0_i32_0, %arg0, %c0_i32_1 : i32, i32, i32, i32, i32
  }
  func.func @transform_1(%arg0: i32, %arg1: i32) -> (i32, i32, i32, i32) {
    %c0_i32 = arith.constant 0 : i32
    %c0_i32_0 = arith.constant 0 : i32
    %c0_i32_1 = arith.constant 0 : i32
    %c0_i32_2 = arith.constant 0 : i32
    return %c0_i32, %c0_i32_0, %arg0, %c0_i32_1 : i32, i32, i32, i32
  }
  func.func @transform_2(%arg0: i32, %arg1: i32) -> (i32, i32, i32, i32, i32) {
    %c0_i32 = arith.constant 0 : i32
    %c0_i32_0 = arith.constant 0 : i32
    %c0_i32_1 = arith.constant 0 : i32
    %c0_i32_2 = arith.constant 0 : i32
    return %arg1, %c0_i32, %c0_i32_0, %arg0, %c0_i32_1 : i32, i32, i32, i32, i32
  }
}

</mosaic_0001>

<llo_original>
// kernel: tpu_custom_call.1
$region0: #{tpu_custom_call.1}
  #allocation0 [shape = 'u32[]', space=smem, size = 0x4, offset = 0x4, fixed_abs, tag = 'smem constant byte address 0x4 - core index']
  #allocation1 [shape = 'u32[144,128]{1,0:T(1,128)}', space=vmem, size = 0x12000, scoped, tag = 'internal scratch']
  %s0 = inlined_call_operand.hbm [shape: f32[2,9,4,2,128], index: 0, kind: input, shape index: {}]
  %s1 = inlined_call_operand.hbm [shape: f32[9,4,2,128], index: 1, kind: input, shape index: {}]
  %s2 = inlined_call_operand.hbm [shape: f32[2,9,4,2,128], index: 2, kind: output, shape index: {}]
  %s3 = sld [smem:[#allocation0]]
  $region49: #{tpu_custom_call.1} parent=0
    _
  %s5 = ssub.s32 1, %s3
  %s6 = scalar_select 0, %s5, %s3
  $region1: #{tpu_custom_call.1} parent=0
    #allocation2 [shape = 'u8[73728]{0}', space=vmem, size = 0x12000, scoped, tag = 'input window, operand 0']
    #allocation3 [shape = 's32[2]{0}', space=sflag, size = 0x8, scoped, tag = 'scoped memory for tpu_custom_call.1']
    #allocation4 [shape = 's32[2]{0}', space=sflag, size = 0x8, scoped, tag = 'scoped memory for tpu_custom_call.1']
    #allocation5 [shape = 'u8[36864]{0}', space=vmem, size = 0x9000, scoped, tag = 'input window, operand 1, single buffered']
    #allocation6 [shape = 's32[1]{0}', space=sflag, size = 0x4, scoped, tag = 'scoped memory for tpu_custom_call.1']
    #allocation7 [shape = 'u8[73728]{0}', space=vmem, size = 0x12000, scoped, tag = 'output window, operand 0']
    %7 = vsyncpa [#allocation3], 0
    %s8 = scalar_lea.sflag [#allocation3], 1
    %9 = vsyncpa %s8, 0
    %10 = vsyncpa [#allocation6], 0
    %11 = vsyncpa [#allocation4], 0
    %s12 = scalar_lea.sflag [#allocation4], 1
    %13 = vsyncpa %s12, 0
    loop: start=0, step=1, limit=4
    $region2: #{tpu_custom_call.1} parent=1 // loop_pre_header
      _
    $region3: #{tpu_custom_call.1} parent=1 // loop_header
      %s15 = sphi 0, %s19
      %p16 = scmp.ge.s32.totalorder %s15, 4
      %s22 = sphi 0, %s34
      %s23 = sphi 0, %s30
      %s24 = sphi 0, %s22
      %s25 = sphi 0, %s23
      %s26 = sphi 0, %s24
      %s27 = sphi 0, %s25
      %s39 = sphi 0, %s41
      %s42 = sphi 0, %s39
      %s43 = sphi 0, %s42
      %s59 = sphi 0, %s43
      %s65 = sphi 0, %s67
      %s68 = sphi 0, %s65
      %s69 = sphi 0, %s68
      %s85 = sphi 0, %s69
      %s93 = sphi 0, %s95
      %s96 = sphi 0, %s93
      %s97 = sphi 0, %s96
      %s113 = sphi 0, %s97
    $region4: #{tpu_custom_call.1} parent=1 // loop_header_branch
      %18 = sbr.rel (%p16) target = $region8
    $region5: #{tpu_custom_call.1} parent=1 // loop_body
      %s20 = ssub.s32 %s15, 1
      %s21 = ssub.s32 %s15, 2
      %s28 = sadd.s32 1, %s23
      %p29 = scmp.ge.s32.totalorder %s28, 2
      %s30 = scalar_select %p29, 0, %s28
      %s31 = sadd.s32 1, %s22
      %s32 = scalar_select %p29, %s31, %s22
      %p33 = scmp.ge.s32.totalorder %s32, 1
      %s34 = scalar_select %p33, 0, %s32
      %s35 = ssub.s32 %s23, %s30
      %s36 = ssub.s32 %s22, %s34
      %s37 = sor.u32 %s35, %s36
      %p38 = scmp.eq.s32.totalorder %s37, 0
      %s40 = sadd.s32 %s39, 1
      %s41 = scalar_select %p38, %s39, %s40
      %p44 = pneg %p38
      %p45 = scmp.eq.s32.totalorder %s15, 1
      %p46 = por %p44, %p45
      %p47 = scmp.ne.s32.totalorder %s39, %s42
      %p48 = scmp.eq.s32.totalorder %s15, 0
      %p49 = por %p47, %p48
      %p50 = scmp.ne.s32.totalorder %s39, %s42
      %p51 = scmp.eq.s32.totalorder %s20, 1
      %p52 = por %p50, %p51
      %p53 = scmp.ne.s32.totalorder %s42, %s43
      %p54 = scmp.eq.s32.totalorder %s20, 0
      %p55 = por %p53, %p54
      %p56 = scmp.ne.s32.totalorder %s42, %s43
      %p57 = scmp.eq.s32.totalorder %s21, 1
      %p58 = por %p56, %p57
      %p60 = scmp.ne.s32.totalorder %s43, %s59
      %p61 = scmp.eq.s32.totalorder %s21, 0
      %p62 = por %p60, %p61
      %s63 = ssub.s32 %s22, %s34
      %p64 = scmp.eq.s32.totalorder %s63, 0
      %s66 = sadd.s32 %s65, 1
      %s67 = scalar_select %p64, %s65, %s66
      %p70 = pneg %p64
      %p71 = scmp.eq.s32.totalorder %s15, 1
      %p72 = por %p70, %p71
      %p73 = scmp.ne.s32.totalorder %s65, %s68
      %p74 = scmp.eq.s32.totalorder %s15, 0
      %p75 = por %p73, %p74
      %p76 = scmp.ne.s32.totalorder %s65, %s68
      %p77 = scmp.eq.s32.totalorder %s20, 1
      %p78 = por %p76, %p77
      %p79 = scmp.ne.s32.totalorder %s68, %s69
      %p80 = scmp.eq.s32.totalorder %s20, 0
      %p81 = por %p79, %p80
      %p82 = scmp.ne.s32.totalorder %s68, %s69
      %p83 = scmp.eq.s32.totalorder %s21, 1
      %p84 = por %p82, %p83
      %p86 = scmp.ne.s32.totalorder %s69, %s85
      %p87 = scmp.eq.s32.totalorder %s21, 0
      %p88 = por %p86, %p87
      %s89 = ssub.s32 %s23, %s30
      %s90 = ssub.s32 %s22, %s34
      %s91 = sor.u32 %s89, %s90
      %p92 = scmp.eq.s32.totalorder %s91, 0
      %s94 = sadd.s32 %s93, 1
      %s95 = scalar_select %p92, %s93, %s94
      %p98 = pneg %p92
      %p99 = scmp.eq.s32.totalorder %s15, 1
      %p100 = por %p98, %p99
      %p101 = scmp.ne.s32.totalorder %s93, %s96
      %p102 = scmp.eq.s32.totalorder %s15, 0
      %p103 = por %p101, %p102
      %p104 = scmp.ne.s32.totalorder %s93, %s96
      %p105 = scmp.eq.s32.totalorder %s20, 1
      %p106 = por %p104, %p105
      %p107 = scmp.ne.s32.totalorder %s96, %s97
      %p108 = scmp.eq.s32.totalorder %s20, 0
      %p109 = por %p107, %p108
      %p110 = scmp.ne.s32.totalorder %s96, %s97
      %p111 = scmp.eq.s32.totalorder %s21, 1
      %p112 = por %p110, %p111
      %p114 = scmp.ne.s32.totalorder %s97, %s113
      %p115 = scmp.eq.s32.totalorder %s21, 0
      %p116 = por %p114, %p115
      %p117 = scmp.le.s32.totalorder 1, %s15
      %p118 = scmp.lt.s32.totalorder %s15, 3
      %p119 = pnand %p117, %p118
      %p120 = pneg %p119
      // Predicated region
      $region9: #{tpu_custom_call.1} parent=5 // pred_check
        _
      $region10: #{tpu_custom_call.1} parent=5 // pred_check_branch
        %122 = sbr.rel (%p119) target = $region12
      $region11: #{tpu_custom_call.1} parent=5 // pred_region
        %s123 = ssub.s32 %s15, 1
        // Predicated region
        $region13: #{tpu_custom_call.1} parent=11 // pred_check
          %p124 = pneg %p81
        $region14: #{tpu_custom_call.1} parent=11 // pred_check_branch
          %126 = sbr.rel (%p124) target = $region16
        $region15: #{tpu_custom_call.1} parent=11 // pred_region
          %s128 = ssub.s32 1152, 1152
          %129 = vsyncadd [#allocation6], %s128
          %s130 = smul.addr %s24, 32
          %s131 = scalar_lea.hbm %s1, %s130
          %s132 = sshll.u32 [#allocation5], 4
          %s133 = int_to_ptr.vmem [resolvable:$true] %s132
          %138 = dma.hbm_to_vmem [thread:$0]  %s131, 1152, %s133, [#allocation6], 32, 32, 2
        $region16: #{tpu_custom_call.1} parent=11 // pred_fallthru
          _
      $region12: #{tpu_custom_call.1} parent=5 // pred_fallthru
        _
      %p139 = scmp.lt.s32.totalorder %s15, 2
      // Predicated region
      $region17: #{tpu_custom_call.1} parent=5 // pred_check
        %p140 = pneg %p139
      $region18: #{tpu_custom_call.1} parent=5 // pred_check_branch
        %142 = sbr.rel (%p140) target = $region20
      $region19: #{tpu_custom_call.1} parent=5 // pred_region
        // Predicated region
        $region21: #{tpu_custom_call.1} parent=19 // pred_check
          %p143 = pneg %p49
        $region22: #{tpu_custom_call.1} parent=19 // pred_check_branch
          %145 = sbr.rel (%p143) target = $region24
        $region23: #{tpu_custom_call.1} parent=19 // pred_region
          %s146 = sand.u32 %s39, 1
          %s147 = scalar_lea.sflag [#allocation3], %s146
          %s148 = sand.u32 %s39, 1
          %s149 = smul.addr %s148, 72
          %s150 = scalar_lea.vmem [#allocation2], %s149
          %s152 = ssub.s32 1152, 1152
          %153 = vsyncadd %s147, %s152
          %s154 = smul.addr %s23, 36
          %s155 = sadd.s32 %s22, %s154
          %s156 = smul.addr %s155, 32
          %s157 = scalar_lea.hbm %s0, %s156
          %s158 = sshll.u32 %s150, 4
          %s159 = int_to_ptr.vmem [resolvable:$true] %s158
          %164 = dma.hbm_to_vmem [thread:$0]  %s157, 1152, %s159, %s147, 32, 32, 2
        $region24: #{tpu_custom_call.1} parent=19 // pred_fallthru
          _
      $region20: #{tpu_custom_call.1} parent=5 // pred_fallthru
        _
      %p165 = scmp.le.s32.totalorder 1, %s15
      %p166 = scmp.lt.s32.totalorder %s15, 3
      %p167 = pnand %p165, %p166
      %p168 = pneg %p167
      // Predicated region
      $region25: #{tpu_custom_call.1} parent=5 // pred_check
        _
      $region26: #{tpu_custom_call.1} parent=5 // pred_check_branch
        %170 = sbr.rel (%p167) target = $region28
      $region27: #{tpu_custom_call.1} parent=5 // pred_region
        %s171 = ssub.s32 %s15, 1
        %s172 = sand.u32 %s42, 1
        %s173 = scalar_lea.sflag [#allocation3], %s172
        %s174 = sand.u32 %s42, 1
        %s175 = smul.addr %s174, 72
        %s176 = scalar_lea.vmem [#allocation2], %s175
        // Predicated region
        $region29: #{tpu_custom_call.1} parent=27 // pred_check
          %p177 = pneg %p55
        $region30: #{tpu_custom_call.1} parent=27 // pred_check_branch
          %179 = sbr.rel (%p177) target = $region32
        $region31: #{tpu_custom_call.1} parent=27 // pred_region
          %180 = dma.done %s173, 1152
        $region32: #{tpu_custom_call.1} parent=27 // pred_fallthru
          _
        // Predicated region
        $region33: #{tpu_custom_call.1} parent=27 // pred_check
          %p181 = pneg %p81
        $region34: #{tpu_custom_call.1} parent=27 // pred_check_branch
          %183 = sbr.rel (%p181) target = $region36
        $region35: #{tpu_custom_call.1} parent=27 // pred_region
          %184 = dma.done [#allocation6], 1152
        $region36: #{tpu_custom_call.1} parent=27 // pred_fallthru
          _
        %s185 = sand.u32 %s42, 1
        %s186 = scalar_lea.sflag [#allocation3], %s185
        %s187 = sand.u32 %s42, 1
        %s188 = smul.addr %s187, 72
        %s189 = scalar_lea.vmem [#allocation2], %s188
        %p190 = pneg %p55
        %p191 = pneg %p52
        %p192 = pneg %p81
        %p193 = pneg %p78
        %p194 = pneg %p109
        %p195 = pneg %p106
        %s196 = sand.u32 %s96, 1
        %s197 = scalar_lea.sflag [#allocation4], %s196
        %s198 = sand.u32 %s96, 1
        %s199 = smul.addr %s198, 72
        %s200 = scalar_lea.vmem [#allocation7], %s199
        %v201 = vld [vmem:[%s176] sm:$0x3]
        %v202 = vld [vmem:[%s176 + $0x2] sm:$0x3]
        %v203 = vld [vmem:[%s176 + $0x4] sm:$0x3]
        %v204 = vld [vmem:[%s176 + $0x6] sm:$0x3]
        %v205 = vld [vmem:[%s176 + $0x8] sm:$0x3]
        %v206 = vld [vmem:[%s176 + $0xa] sm:$0x3]
        %v207 = vld [vmem:[%s176 + $0xc] sm:$0x3]
        %v208 = vld [vmem:[%s176 + $0xe] sm:$0x3]
        %v209 = vld [vmem:[%s176 + $0x10] sm:$0x3]
        %v210 = vld [vmem:[%s176 + $0x12] sm:$0x3]
        %v211 = vld [vmem:[%s176 + $0x14] sm:$0x3]
        %v212 = vld [vmem:[%s176 + $0x16] sm:$0x3]
        %v213 = vld [vmem:[%s176 + $0x18] sm:$0x3]
        %v214 = vld [vmem:[%s176 + $0x1a] sm:$0x3]
        %v215 = vld [vmem:[%s176 + $0x1c] sm:$0x3]
        %v216 = vld [vmem:[%s176 + $0x1e] sm:$0x3]
        %v217 = vld [vmem:[%s176 + $0x20] sm:$0x3]
        %v218 = vld [vmem:[%s176 + $0x22] sm:$0x3]
        %v219 = vld [vmem:[%s176 + $0x24] sm:$0x3]
        %v220 = vld [vmem:[%s176 + $0x26] sm:$0x3]
        %v221 = vld [vmem:[%s176 + $0x28] sm:$0x3]
        %v222 = vld [vmem:[%s176 + $0x2a] sm:$0x3]
        %v223 = vld [vmem:[%s176 + $0x2c] sm:$0x3]
        %v224 = vld [vmem:[%s176 + $0x2e] sm:$0x3]
        %v225 = vld [vmem:[%s176 + $0x30] sm:$0x3]
        %v226 = vld [vmem:[%s176 + $0x32] sm:$0x3]
        %v227 = vld [vmem:[%s176 + $0x34] sm:$0x3]
        %v228 = vld [vmem:[%s176 + $0x36] sm:$0x3]
        %v229 = vld [vmem:[%s176 + $0x38] sm:$0x3]
        %v230 = vld [vmem:[%s176 + $0x3a] sm:$0x3]
        %v231 = vld [vmem:[%s176 + $0x3c] sm:$0x3]
        %v232 = vld [vmem:[%s176 + $0x3e] sm:$0x3]
        %v233 = vld [vmem:[%s176 + $0x40] sm:$0x3]
        %v234 = vld [vmem:[%s176 + $0x42] sm:$0x3]
        %v235 = vld [vmem:[%s176 + $0x44] sm:$0x3]
        %v236 = vld [vmem:[%s176 + $0x46] sm:$0x3]
        %v237 = vld [vmem:[#allocation5] sm:$0x3]
        %v238 = vld [vmem:[#allocation5 + $0x2] sm:$0x3]
        %v239 = vld [vmem:[#allocation5 + $0x4] sm:$0x3]
        %v240 = vld [vmem:[#allocation5 + $0x6] sm:$0x3]
        %v241 = vld [vmem:[#allocation5 + $0x8] sm:$0x3]
        %v242 = vld [vmem:[#allocation5 + $0xa] sm:$0x3]
        %v243 = vld [vmem:[#allocation5 + $0xc] sm:$0x3]
        %v244 = vld [vmem:[#allocation5 + $0xe] sm:$0x3]
        %v245 = vld [vmem:[#allocation5 + $0x10] sm:$0x3]
        %v246 = vld [vmem:[#allocation5 + $0x12] sm:$0x3]
        %v247 = vld [vmem:[#allocation5 + $0x14] sm:$0x3]
        %v248 = vld [vmem:[#allocation5 + $0x16] sm:$0x3]
        %v249 = vld [vmem:[#allocation5 + $0x18] sm:$0x3]
        %v250 = vld [vmem:[#allocation5 + $0x1a] sm:$0x3]
        %v251 = vld [vmem:[#allocation5 + $0x1c] sm:$0x3]
        %v252 = vld [vmem:[#allocation5 + $0x1e] sm:$0x3]
        %v253 = vld [vmem:[#allocation5 + $0x20] sm:$0x3]
        %v254 = vld [vmem:[#allocation5 + $0x22] sm:$0x3]
        %v255 = vld [vmem:[#allocation5 + $0x24] sm:$0x3]
        %v256 = vld [vmem:[#allocation5 + $0x26] sm:$0x3]
        %v257 = vld [vmem:[#allocation5 + $0x28] sm:$0x3]
        %v258 = vld [vmem:[#allocation5 + $0x2a] sm:$0x3]
        %v259 = vld [vmem:[#allocation5 + $0x2c] sm:$0x3]
        %v260 = vld [vmem:[#allocation5 + $0x2e] sm:$0x3]
        %v261 = vld [vmem:[#allocation5 + $0x30] sm:$0x3]
        %v262 = vld [vmem:[#allocation5 + $0x32] sm:$0x3]
        %v263 = vld [vmem:[#allocation5 + $0x34] sm:$0x3]
        %v264 = vld [vmem:[#allocation5 + $0x36] sm:$0x3]
        %v265 = vld [vmem:[#allocation5 + $0x38] sm:$0x3]
        %v266 = vld [vmem:[#allocation5 + $0x3a] sm:$0x3]
        %v267 = vld [vmem:[#allocation5 + $0x3c] sm:$0x3]
        %v268 = vld [vmem:[#allocation5 + $0x3e] sm:$0x3]
        %v269 = vld [vmem:[#allocation5 + $0x40] sm:$0x3]
        %v270 = vld [vmem:[#allocation5 + $0x42] sm:$0x3]
        %v271 = vld [vmem:[#allocation5 + $0x44] sm:$0x3]
        %v272 = vld [vmem:[#allocation5 + $0x46] sm:$0x3]
        %v273 = vmul.f32 %v201, %v239
        %v274 = vmul.f32 %v205, %v243
        %v275 = vmul.f32 %v209, %v247
        %v276 = vmul.f32 %v213, %v251
        %v277 = vmul.f32 %v217, %v255
        %v278 = vmul.f32 %v221, %v259
        %v279 = vmul.f32 %v225, %v263
        %v280 = vmul.f32 %v229, %v267
        %v281 = vmul.f32 %v233, %v271
        %v282 = vadd.f32 %v273, %v237
        %v283 = vadd.f32 %v274, %v241
        %v284 = vadd.f32 %v275, %v245
        %v285 = vadd.f32 %v276, %v249
        %v286 = vadd.f32 %v277, %v253
        %v287 = vadd.f32 %v278, %v257
        %v288 = vadd.f32 %v279, %v261
        %v289 = vadd.f32 %v280, %v265
        %v290 = vadd.f32 %v281, %v269
        %v291 = vmul.f32 %v202, %v240
        %v292 = vmul.f32 %v206, %v244
        %v293 = vmul.f32 %v210, %v248
        %v294 = vmul.f32 %v214, %v252
        %v295 = vmul.f32 %v218, %v256
        %v296 = vmul.f32 %v222, %v260
        %v297 = vmul.f32 %v226, %v264
        %v298 = vmul.f32 %v230, %v268
        %v299 = vmul.f32 %v234, %v272
        %v300 = vadd.f32 %v291, %v238
        %v301 = vadd.f32 %v292, %v242
        %v302 = vadd.f32 %v293, %v246
        %v303 = vadd.f32 %v294, %v250
        %v304 = vadd.f32 %v295, %v254
        %v305 = vadd.f32 %v296, %v258
        %v306 = vadd.f32 %v297, %v262
        %v307 = vadd.f32 %v298, %v266
        %v308 = vadd.f32 %v299, %v270
        %v309 = vmul.f32 %v203, 1.442695
        %v310 = vpow.pop %v309
        %v311 = vmul.f32 %v207, 1.442695
        %v312 = vpow.pop %v311
        %v313 = vmul.f32 %v211, 1.442695
        %v314 = vpow.pop %v313
        %v315 = vmul.f32 %v215, 1.442695
        %v316 = vpow.pop %v315
        %v317 = vmul.f32 %v219, 1.442695
        %v318 = vpow.pop %v317
        %v319 = vmul.f32 %v223, 1.442695
        %v320 = vpow.pop %v319
        %v321 = vmul.f32 %v227, 1.442695
        %v322 = vpow.pop %v321
        %v323 = vmul.f32 %v231, 1.442695
        %v324 = vpow.pop %v323
        %v325 = vmul.f32 %v235, 1.442695
        %v326 = vpow.pop %v325
        %v327 = vmul.f32 %v310, %v239
        %v328 = vmul.f32 %v312, %v243
        %v329 = vmul.f32 %v314, %v247
        %v330 = vmul.f32 %v316, %v251
        %v331 = vmul.f32 %v318, %v255
        %v332 = vmul.f32 %v320, %v259
        %v333 = vmul.f32 %v322, %v263
        %v334 = vmul.f32 %v324, %v267
        %v335 = vmul.f32 %v326, %v271
        %v336 = vmul.f32 %v327, 0.5
        %v337 = vmul.f32 %v328, 0.5
        %v338 = vmul.f32 %v329, 0.5
        %v339 = vmul.f32 %v330, 0.5
        %v340 = vmul.f32 %v331, 0.5
        %v341 = vmul.f32 %v332, 0.5
        %v342 = vmul.f32 %v333, 0.5
        %v343 = vmul.f32 %v334, 0.5
        %v344 = vmul.f32 %v335, 0.5
        %v345 = vmul.f32 %v204, 1.442695
        %v346 = vpow.pop %v345
        %v347 = vmul.f32 %v208, 1.442695
        %v348 = vpow.pop %v347
        %v349 = vmul.f32 %v212, 1.442695
        %v350 = vpow.pop %v349
        %v351 = vmul.f32 %v216, 1.442695
        %v352 = vpow.pop %v351
        %v353 = vmul.f32 %v220, 1.442695
        %v354 = vpow.pop %v353
        %v355 = vmul.f32 %v224, 1.442695
        %v356 = vpow.pop %v355
        %v357 = vmul.f32 %v228, 1.442695
        %v358 = vpow.pop %v357
        %v359 = vmul.f32 %v232, 1.442695
        %v360 = vpow.pop %v359
        %v361 = vmul.f32 %v236, 1.442695
        %v362 = vpow.pop %v361
        %v363 = vmul.f32 %v346, %v240
        %v364 = vmul.f32 %v348, %v244
        %v365 = vmul.f32 %v350, %v248
        %v366 = vmul.f32 %v352, %v252
        %v367 = vmul.f32 %v354, %v256
        %v368 = vmul.f32 %v356, %v260
        %v369 = vmul.f32 %v358, %v264
        %v370 = vmul.f32 %v360, %v268
        %v371 = vmul.f32 %v362, %v272
        %v372 = vmul.f32 %v363, 0.5
        %v373 = vmul.f32 %v364, 0.5
        %v374 = vmul.f32 %v365, 0.5
        %v375 = vmul.f32 %v366, 0.5
        %v376 = vmul.f32 %v367, 0.5
        %v377 = vmul.f32 %v368, 0.5
        %v378 = vmul.f32 %v369, 0.5
        %v379 = vmul.f32 %v370, 0.5
        %v380 = vmul.f32 %v371, 0.5
        %v381 = vsub.f32 %v282, %v336
        %v382 = vsub.f32 %v283, %v337
        %v383 = vsub.f32 %v284, %v338
        %v384 = vsub.f32 %v285, %v339
        %v385 = vsub.f32 %v286, %v340
        %v386 = vsub.f32 %v287, %v341
        %v387 = vsub.f32 %v288, %v342
        %v388 = vsub.f32 %v289, %v343
        %v389 = vsub.f32 %v290, %v344
        %v390 = vsub.f32 %v300, %v372
        %v391 = vsub.f32 %v301, %v373
        %v392 = vsub.f32 %v302, %v374
        %v393 = vsub.f32 %v303, %v375
        %v394 = vsub.f32 %v304, %v376
        %v395 = vsub.f32 %v305, %v377
        %v396 = vsub.f32 %v306, %v378
        %v397 = vsub.f32 %v307, %v379
        %v398 = vsub.f32 %v308, %v380
        %v399 = vadd.f32 %v282, %v336
        %v400 = vadd.f32 %v283, %v337
        %v401 = vadd.f32 %v284, %v338
        %v402 = vadd.f32 %v285, %v339
        %v403 = vadd.f32 %v286, %v340
        %v404 = vadd.f32 %v287, %v341
        %v405 = vadd.f32 %v288, %v342
        %v406 = vadd.f32 %v289, %v343
        %v407 = vadd.f32 %v290, %v344
        %v408 = vadd.f32 %v300, %v372
        %v409 = vadd.f32 %v301, %v373
        %v410 = vadd.f32 %v302, %v374
        %v411 = vadd.f32 %v303, %v375
        %v412 = vadd.f32 %v304, %v376
        %v413 = vadd.f32 %v305, %v377
        %v414 = vadd.f32 %v306, %v378
        %v415 = vadd.f32 %v307, %v379
        %v416 = vadd.f32 %v308, %v380
        %417 = vst [vmem:[%s200] sm:$0x3] %v381
        %418 = vst [vmem:[%s200 + $0x2] sm:$0x3] %v390
        %419 = vst [vmem:[%s200 + $0x4] sm:$0x3] %v399
        %420 = vst [vmem:[%s200 + $0x6] sm:$0x3] %v408
        %421 = vst [vmem:[%s200 + $0x8] sm:$0x3] %v382
        %422 = vst [vmem:[%s200 + $0xa] sm:$0x3] %v391
        %423 = vst [vmem:[%s200 + $0xc] sm:$0x3] %v400
        %424 = vst [vmem:[%s200 + $0xe] sm:$0x3] %v409
        %425 = vst [vmem:[%s200 + $0x10] sm:$0x3] %v383
        %426 = vst [vmem:[%s200 + $0x12] sm:$0x3] %v392
        %427 = vst [vmem:[%s200 + $0x14] sm:$0x3] %v401
        %428 = vst [vmem:[%s200 + $0x16] sm:$0x3] %v410
        %429 = vst [vmem:[%s200 + $0x18] sm:$0x3] %v384
        %430 = vst [vmem:[%s200 + $0x1a] sm:$0x3] %v393
        %431 = vst [vmem:[%s200 + $0x1c] sm:$0x3] %v402
        %432 = vst [vmem:[%s200 + $0x1e] sm:$0x3] %v411
        %433 = vst [vmem:[%s200 + $0x20] sm:$0x3] %v385
        %434 = vst [vmem:[%s200 + $0x22] sm:$0x3] %v394
        %435 = vst [vmem:[%s200 + $0x24] sm:$0x3] %v403
        %436 = vst [vmem:[%s200 + $0x26] sm:$0x3] %v412
        %437 = vst [vmem:[%s200 + $0x28] sm:$0x3] %v386
        %438 = vst [vmem:[%s200 + $0x2a] sm:$0x3] %v395
        %439 = vst [vmem:[%s200 + $0x2c] sm:$0x3] %v404
        %440 = vst [vmem:[%s200 + $0x2e] sm:$0x3] %v413
        %441 = vst [vmem:[%s200 + $0x30] sm:$0x3] %v387
        %442 = vst [vmem:[%s200 + $0x32] sm:$0x3] %v396
        %443 = vst [vmem:[%s200 + $0x34] sm:$0x3] %v405
        %444 = vst [vmem:[%s200 + $0x36] sm:$0x3] %v414
        %445 = vst [vmem:[%s200 + $0x38] sm:$0x3] %v388
        %446 = vst [vmem:[%s200 + $0x3a] sm:$0x3] %v397
        %447 = vst [vmem:[%s200 + $0x3c] sm:$0x3] %v406
        %448 = vst [vmem:[%s200 + $0x3e] sm:$0x3] %v415
        %449 = vst [vmem:[%s200 + $0x40] sm:$0x3] %v389
        %450 = vst [vmem:[%s200 + $0x42] sm:$0x3] %v398
        %451 = vst [vmem:[%s200 + $0x44] sm:$0x3] %v407
        %452 = vst [vmem:[%s200 + $0x46] sm:$0x3] %v416
        %s453 = sand.u32 %s96, 1
        %s454 = scalar_lea.sflag [#allocation4], %s453
        %s455 = sand.u32 %s96, 1
        %s456 = smul.addr %s455, 72
        %s457 = scalar_lea.vmem [#allocation7], %s456
        // Predicated region
        $region37: #{tpu_custom_call.1} parent=27 // pred_check
          %p458 = pneg %p106
        $region38: #{tpu_custom_call.1} parent=27 // pred_check_branch
          %460 = sbr.rel (%p458) target = $region40
        $region39: #{tpu_custom_call.1} parent=27 // pred_region
          %s462 = ssub.s32 1152, 1152
          %463 = vsyncadd %s454, %s462
          %s464 = smul.addr %s25, 36
          %s465 = sadd.s32 %s24, %s464
          %s466 = smul.addr %s465, 32
          %s467 = scalar_lea.hbm %s2, %s466
          %s468 = sshll.u32 %s457, 4
          %s469 = int_to_ptr.vmem [resolvable:$true] %s468
          %474 = dma.vmem_to_hbm [thread:$0]  %s469, 1152, %s467, %s454, 32, 32, 2
        $region40: #{tpu_custom_call.1} parent=27 // pred_fallthru
          _
      $region28: #{tpu_custom_call.1} parent=5 // pred_fallthru
        _
      %p475 = scmp.le.s32.totalorder 2, %s15
      // Predicated region
      $region41: #{tpu_custom_call.1} parent=5 // pred_check
        %p476 = pneg %p475
      $region42: #{tpu_custom_call.1} parent=5 // pred_check_branch
        %478 = sbr.rel (%p476) target = $region44
      $region43: #{tpu_custom_call.1} parent=5 // pred_region
        %s479 = ssub.s32 %s15, 2
        // Predicated region
        $region45: #{tpu_custom_call.1} parent=43 // pred_check
          %p480 = pneg %p112
        $region46: #{tpu_custom_call.1} parent=43 // pred_check_branch
          %482 = sbr.rel (%p480) target = $region48
        $region47: #{tpu_custom_call.1} parent=43 // pred_region
          %s483 = sand.u32 %s97, 1
          %s484 = scalar_lea.sflag [#allocation4], %s483
          %s485 = sand.u32 %s97, 1
          %s486 = smul.addr %s485, 72
          %s487 = scalar_lea.vmem [#allocation7], %s486
          %488 = dma.done %s484, 1152
        $region48: #{tpu_custom_call.1} parent=43 // pred_fallthru
          _
      $region44: #{tpu_custom_call.1} parent=5 // pred_fallthru
        _
    $region6: #{tpu_custom_call.1} parent=1 // loop_footer
      %s19 = sadd.s32 1, %s15
    $region7: #{tpu_custom_call.1} parent=1 // loop_footer_branch
      %14 = sbr.rel target = $region3
    $region8: #{tpu_custom_call.1} parent=1 // loop_exit
      _
    %489 = vsyncpa [#allocation3], 1
    %s490 = scalar_lea.sflag [#allocation3], 1
    %491 = vsyncpa %s490, 1
    %492 = vsyncpa [#allocation6], 1
    %493 = vsyncpa [#allocation4], 1
    %s494 = scalar_lea.sflag [#allocation4], 1
    %495 = vsyncpa %s494, 1

</llo_original>
